<compile_context>
chip_gen: v7x
topology: tpu7x:2x2x1
jax: 0.10.0
libtpu: 0.0.40
codegen_flags: <defaults>
</compile_context>

<pallas_src>
import functools

import jax
import jax.numpy as jnp
from jax.experimental import pallas as pl
from jax.experimental.pallas import tpu as pltpu

_LANE = 128


def _cdiv(a, b):
    return -(-a // b)


def _round_down(x, m):
    return (x // m) * m


def _tpu_caps():
    """(physical VMEM bytes, TensorCores per chip) with safe fallbacks."""
    vmem_cap = 64 * 1024 * 1024
    try:
        info = pltpu.get_tpu_info()
        vmem_cap = int(getattr(info, "vmem_capacity_bytes", vmem_cap))
    except Exception:
        pass
    cores = 1
    try:
        kind = jax.devices()[0].device_kind.lower()
        if "v7" in kind or "7x" in kind:
            cores = 2            # v7x: 2 TensorCores per chip
    except Exception:
        pass
    return vmem_cap, cores


def _triplet_kernel(a_ref, p_ref, n_ref, w_ref, *rest, margin, rows_valid,
                    tb, tiles_per_split, use_seg_dot):
    if use_seg_dot:
        s_ref, o_ref, acc_ref = rest
    else:
        o_ref, acc_ref = rest

    i = pl.program_id(1)

    @pl.when(i == 0)
    def _():
        acc_ref[...] = jnp.zeros_like(acc_ref)

    a = a_ref[...].astype(jnp.float32)
    p = p_ref[...].astype(jnp.float32)
    n = n_ref[...].astype(jnp.float32)

    # Fused distance difference: dp - dn = sum((p - n) * (p + n - 2a)).
    d = (p - n) * ((p + n) - 2.0 * a)                          # (tb, d_lane)

    if use_seg_dot:
        # Segmented lane reduction on the MXU (k packed rows per lane row).
        seg = jnp.dot(d, s_ref[...], preferred_element_type=jnp.float32)
    else:
        seg = jnp.sum(d, axis=-1, keepdims=True)               # XLU (k == 1)

    # Mask rows of the (possibly partial) last tile: OOB block rows are
    # undefined, so zero them explicitly (do NOT rely on zero weights).
    tile = pl.program_id(0) * tiles_per_split + i
    row_ids = jax.lax.broadcasted_iota(jnp.int32, seg.shape, 0) + tile * tb
    seg = jnp.where(row_ids < rows_valid, seg, 0.0)

    losses = jnp.maximum(seg + margin, 0.0)                    # (tb, k)

    # Weighted reduction on the MXU: W (k, tb) @ L (tb, k); masked rows carry
    # weight 0, so only trace(acc) holds the true weighted sum.
    acc_ref[...] += jnp.dot(w_ref[...], losses,
                            preferred_element_type=jnp.float32)

    @pl.when(i == pl.num_programs(1) - 1)
    def _():
        kk = acc_ref[...]
        r = jax.lax.broadcasted_iota(jnp.int32, kk.shape, 0)
        c = jax.lax.broadcasted_iota(jnp.int32, kk.shape, 1)
        total = jnp.sum(jnp.where(r == c, kk, 0.0))
        o_ref[...] = total + jnp.zeros_like(o_ref)


def triplet_loss_weighted(anchor, positive, negative, weights, *, margin,
                          size_average=True):
    """anchor/positive/negative: (B, D); weights: (B,). Returns scalar f32."""
    anchor = jnp.asarray(anchor)
    positive = jnp.asarray(positive)
    negative = jnp.asarray(negative)
    weights = jnp.asarray(weights, dtype=jnp.float32)
    B, D = anchor.shape
    margin = float(margin)

    # ---- lane packing: k original rows per packed lane row, no feature pad --
    if D >= _LANE:
        k, d_lane = 1, D
    else:
        k, d_lane = _LANE // D, (_LANE // D) * D

    B_main = (B // k) * k                    # rows the kernel handles
    # Tail (< k rows) handled in plain JAX so the big tensors are never padded.
    tail_sum = jnp.float32(0.0)
    if B_main < B:
        ta = anchor[B_main:].astype(jnp.float32)
        tp = positive[B_main:].astype(jnp.float32)
        tn = negative[B_main:].astype(jnp.float32)
        dp = jnp.sum((ta - tp) ** 2, axis=1)
        dn = jnp.sum((ta - tn) ** 2, axis=1)
        tail_sum = jnp.sum(jnp.maximum(dp - dn + margin, 0.0)
                           * weights[B_main:])

    if B_main == 0:                          # degenerate tiny batch (B < k)
        loss_sum = tail_sum
        return loss_sum / jnp.float32(B) if size_average else loss_sum

    rows_valid = B_main // k                 # packed rows with real data

    vmem_cap, cores = _tpu_caps()
    itemsize = jnp.dtype(anchor.dtype).itemsize
    # ~4 MiB per input block (v6e/v5e), capacity-scaled on v7x's 64 MiB VMEM.
    per_block = min(4 << 20, max(512 << 10, vmem_cap // 24))
    tb = max(_LANE, _round_down(per_block // (d_lane * itemsize), _LANE))
    # TODO(synk): tile the feature dim for very large D (one block currently
    # spans the full feature width).

    def pack(x):
        x = x[:B_main] if B_main != B else x
        return x.reshape(rows_valid, d_lane)  # contiguous, copy-free reshape

    a_p, p_p, n_p = pack(anchor), pack(positive), pack(negative)

    if rows_valid < _LANE:
        # Tiny batch only: pad packed rows up to one 128-row tile (cheap) so
        # blocks never exceed the array. Large batches never take this path.
        pad = _LANE - rows_valid
        a_p = jnp.pad(a_p, ((0, pad), (0, 0)))
        p_p = jnp.pad(p_p, ((0, pad), (0, 0)))
        n_p = jnp.pad(n_p, ((0, pad), (0, 0)))
        rows_arr, tb = _LANE, _LANE
    else:
        rows_arr = rows_valid
        tb = min(tb, _round_down(rows_valid, _LANE))   # block rows <= array rows

    num_tiles = _cdiv(rows_arr, tb)
    splits = cores if (cores > 1 and num_tiles % cores == 0) else 1
    tiles_per_split = num_tiles // splits
    rows_total = num_tiles * tb

    # Weights: tiny, lane-dense (k, rows_total) layout, fully zero-padded so
    # the weight blocks never read undefined memory.
    w_p = weights[:B_main].reshape(rows_valid, k).T           # (k, rows_valid)
    w_p = jnp.pad(w_p, ((0, 0), (0, rows_total - rows_valid)))

    operands = [a_p, p_p, n_p, w_p]
    row_map = lambda c, i: (c * tiles_per_split + i, 0)
    in_specs = [pl.BlockSpec((tb, d_lane), row_map)] * 3 + [
        pl.BlockSpec((k, tb), lambda c, i: (0, c * tiles_per_split + i))]
    use_seg_dot = k > 1
    if use_seg_dot:
        # 0/1 segment-sum matrix: lane l belongs to packed slot l // D.
        seg_id = jnp.arange(d_lane, dtype=jnp.int32) // jnp.int32(D)
        s_mat = (seg_id[:, None] == jnp.arange(k, dtype=jnp.int32)[None, :]
                 ).astype(jnp.float32)
        operands.append(s_mat)
        in_specs.append(pl.BlockSpec((d_lane, k), lambda c, i: (0, 0)))

    # Corrected VMEM footprint: double-buffered data + lane-dense weights
    # (padded to 8 sublanes) + f32 in-kernel temporaries + output + headroom.
    data_block = tb * d_lane * itemsize
    w_block = max(k, 8) * tb * 4
    est = (3 * 2 * data_block + 2 * w_block + 3 * tb * d_lane * 4
           + 2 * 8 * _LANE * 4 + (2 << 20))
    vmem_limit = int(min(0.75 * vmem_cap, max(32 << 20, 2 * est)))

    kernel = functools.partial(
        _triplet_kernel, margin=margin, rows_valid=rows_valid, tb=tb,
        tiles_per_split=tiles_per_split, use_seg_dot=use_seg_dot)

    # TODO(synk): switch axis 0 to pltpu.CORE_PARALLEL if plain "parallel"
    # does not shard the split axis across v7x's two TensorCores.
    out = pl.pallas_call(
        kernel,
        out_shape=jax.ShapeDtypeStruct((splits, 8, _LANE), jnp.float32),
        grid=(splits, tiles_per_split),
        in_specs=in_specs,
        out_specs=pl.BlockSpec((1, 8, _LANE), lambda c, i: (c, 0, 0)),
        scratch_shapes=[pltpu.VMEM((k, k), jnp.float32)],
        compiler_params=pltpu.CompilerParams(
            dimension_semantics=("parallel", "arbitrary"),
            vmem_limit_bytes=vmem_limit),
    )(*operands)

    # out[c, :, :] is split c's partial sum broadcast over one (8,128) tile.
    loss_sum = jnp.sum(out[:, 0, 0]) + tail_sum
    if size_average:
        return loss_sum / jnp.float32(B)
    return loss_sum


def _reference(anchor, positive, negative, weights, margin, size_average=True):
    dp = jnp.sum((anchor - positive) ** 2, axis=1)
    dn = jnp.sum((anchor - negative) ** 2, axis=1)
    losses = jax.nn.relu(dp - dn + margin) * weights
    return jnp.mean(losses) if size_average else jnp.sum(losses)


if __name__ == "__main__":
    key = jax.random.PRNGKey(0)
    k1, k2, k3, k4 = jax.random.split(key, 4)

    B, D = 8, 32
    margin = 0.5

    anchor = jax.random.normal(k1, (B, D), dtype=jnp.float32)
    positive = jax.random.normal(k2, (B, D), dtype=jnp.float32)
    negative = jax.random.normal(k3, (B, D), dtype=jnp.float32)
    weights = jax.random.uniform(k4, (B,), dtype=jnp.float32)

    out = triplet_loss_weighted(anchor, positive, negative, weights,
                                margin=margin, size_average=True)
    out = jax.block_until_ready(out)
    ref = _reference(anchor, positive, negative, weights, margin, True)
    assert jnp.allclose(out, ref, rtol=1e-5, atol=1e-5), (out, ref)

    out_sum = triplet_loss_weighted(anchor, positive, negative, weights,
                                    margin=margin, size_average=False)
    out_sum = jax.block_until_ready(out_sum)
    ref_sum = _reference(anchor, positive, negative, weights, margin, False)
    assert jnp.allclose(out_sum, ref_sum, rtol=1e-5, atol=1e-5), (out_sum, ref_sum)

    print("KERNEL_OK")
</pallas_src>

<mosaic_0001>
module attributes {stable_mosaic.version = 11 : i64} {
  func.func @_triplet_kernel(%arg0: i32, %arg1: i32, %arg2: memref<128x128xf32, #tpu.memory_space<vmem>>, %arg3: memref<128x128xf32, #tpu.memory_space<vmem>>, %arg4: memref<128x128xf32, #tpu.memory_space<vmem>>, %arg5: memref<4x128xf32, #tpu.memory_space<vmem>>, %arg6: memref<128x4xf32, #tpu.memory_space<vmem>>, %arg7: memref<1x8x128xf32, #tpu.memory_space<vmem>>, %arg8: memref<4x4xf32, #tpu.memory_space<vmem>>) attributes {dimension_semantics = [#tpu.dimension_semantics<parallel>, #tpu.dimension_semantics<arbitrary>], iteration_bounds = array<i64: 1, 1>, scalar_prefetch = 0 : i64, scratch_operands = 1 : i64, tpu.core_type = #tpu.core_type<tc>, window_params = [{transform_indices = @transform_0, window_bounds = array<i64: 128, 128>}, {transform_indices = @transform_1, window_bounds = array<i64: 128, 128>}, {transform_indices = @transform_2, window_bounds = array<i64: 128, 128>}, {transform_indices = @transform_3, window_bounds = array<i64: 4, 128>}, {pipeline_mode = #tpu.pipeline_mode<synchronous>, transform_indices = @transform_4, window_bounds = array<i64: 128, 4>}, {transform_indices = @transform_5, window_bounds = array<i64: 1, 8, 128>}]} {
    %c0_i32 = arith.constant 0 : i32
    %0 = arith.cmpi eq, %arg1, %c0_i32 : i32
    %1 = arith.extui %0 : i1 to i32
    %c0_i32_0 = arith.constant 0 : i32
    %2 = arith.cmpi ne, %1, %c0_i32_0 : i32
    scf.if %2 {
      %cst_21 = arith.constant 0.000000e+00 : f32
      %36 = vector.broadcast %cst_21 : f32 to vector<4x4xf32>
      %c0_22 = arith.constant 0 : index
      %c0_23 = arith.constant 0 : index
      %37 = vector.load %arg8[%c0_22, %c0_23] : memref<4x4xf32, #tpu.memory_space<vmem>>, vector<4x4xf32>
      tpu.vector_store %arg8[%c0_22, %c0_23], %36 {strides = array<i32>} : memref<4x4xf32, #tpu.memory_space<vmem>>, vector<4x4xf32>,
    } else {
    }
    %c0 = arith.constant 0 : index
    %c0_1 = arith.constant 0 : index
    %3 = vector.load %arg2[%c0, %c0_1] : memref<128x128xf32, #tpu.memory_space<vmem>>, vector<128x128xf32>
    %c0_2 = arith.constant 0 : index
    %c0_3 = arith.constant 0 : index
    %4 = vector.load %arg3[%c0_2, %c0_3] : memref<128x128xf32, #tpu.memory_space<vmem>>, vector<128x128xf32>
    %c0_4 = arith.constant 0 : index
    %c0_5 = arith.constant 0 : index
    %5 = vector.load %arg4[%c0_4, %c0_5] : memref<128x128xf32, #tpu.memory_space<vmem>>, vector<128x128xf32>
    %6 = arith.subf %4, %5 : vector<128x128xf32>
    %7 = arith.addf %4, %5 : vector<128x128xf32>
    %cst = arith.constant 2.000000e+00 : f32
    %8 = vector.broadcast %cst : f32 to vector<128x128xf32>
    %9 = arith.mulf %8, %3 : vector<128x128xf32>
    %10 = arith.subf %7, %9 : vector<128x128xf32>
    %11 = arith.mulf %6, %10 : vector<128x128xf32>
    %c0_6 = arith.constant 0 : index
    %c0_7 = arith.constant 0 : index
    %12 = vector.load %arg6[%c0_6, %c0_7] : memref<128x4xf32, #tpu.memory_space<vmem>>, vector<128x4xf32>
    %cst_8 = arith.constant dense<0.000000e+00> : vector<128x4xf32>
    %13 = tpu.matmul %11, %12, %cst_8 {dimension_numbers = #tpu.dot_dimension_numbers<[1], [0], [0], [1], [0, 0, 1, 1], [], []>} : vector<128x128xf32>, vector<128x4xf32>, vector<128x4xf32> -> vector<128x4xf32>
    %c1_i32 = arith.constant 1 : i32
    %14 = arith.muli %arg0, %c1_i32 : i32
    %15 = arith.addi %14, %arg1 : i32
    %16 = tpu.iota {dimensions = array<i32: 0>} : vector<128x4xi32>
    %c128_i32 = arith.constant 128 : i32
    %17 = arith.muli %15, %c128_i32 : i32
    %18 = vector.broadcast %17 : i32 to vector<128x4xi32>
    %19 = arith.addi %16, %18 : vector<128x4xi32>
    %c2_i32 = arith.constant 2 : i32
    %20 = vector.broadcast %c2_i32 : i32 to vector<128x4xi32>
    %21 = arith.cmpi slt, %19, %20 : vector<128x4xi32>
    %cst_9 = arith.constant 0.000000e+00 : f32
    %22 = vector.broadcast %cst_9 : f32 to vector<128x4xf32>
    %23 = arith.select %21, %13, %22 : vector<128x4xi1>, vector<128x4xf32>
    %cst_10 = arith.constant 5.000000e-01 : f32
    %24 = vector.broadcast %cst_10 : f32 to vector<128x4xf32>
    %25 = arith.addf %23, %24 : vector<128x4xf32>
    %cst_11 = arith.constant 0.000000e+00 : f32
    %26 = vector.broadcast %cst_11 : f32 to vector<128x4xf32>
    %27 = arith.maximumf %25, %26 : vector<128x4xf32>
    %c0_12 = arith.constant 0 : index
    %c0_13 = arith.constant 0 : index
    %28 = vector.load %arg8[%c0_12, %c0_13] : memref<4x4xf32, #tpu.memory_space<vmem>>, vector<4x4xf32>
    %c0_14 = arith.constant 0 : index
    %c0_15 = arith.constant 0 : index
    %29 = vector.load %arg5[%c0_14, %c0_15] : memref<4x128xf32, #tpu.memory_space<vmem>>, vector<4x128xf32>
    %cst_16 = arith.constant dense<0.000000e+00> : vector<4x4xf32>
    %30 = tpu.matmul %29, %27, %cst_16 {dimension_numbers = #tpu.dot_dimension_numbers<[1], [0], [0], [1], [0, 0, 1, 1], [], []>} : vector<4x128xf32>, vector<128x4xf32>, vector<4x4xf32> -> vector<4x4xf32>
    %31 = arith.addf %28, %30 : vector<4x4xf32>
    %c0_17 = arith.constant 0 : index
    %c0_18 = arith.constant 0 : index
    %32 = vector.load %arg8[%c0_17, %c0_18] : memref<4x4xf32, #tpu.memory_space<vmem>>, vector<4x4xf32>
    tpu.vector_store %arg8[%c0_17, %c0_18], %31 {strides = array<i32>} : memref<4x4xf32, #tpu.memory_space<vmem>>, vector<4x4xf32>,
    %c0_i32_19 = arith.constant 0 : i32
    %33 = arith.cmpi eq, %arg1, %c0_i32_19 : i32
    %34 = arith.extui %33 : i1 to i32
    %c0_i32_20 = arith.constant 0 : i32
    %35 = arith.cmpi ne, %34, %c0_i32_20 : i32
    scf.if %35 {
      %c0_21 = arith.constant 0 : index
      %c0_22 = arith.constant 0 : index
      %36 = vector.load %arg8[%c0_21, %c0_22] : memref<4x4xf32, #tpu.memory_space<vmem>>, vector<4x4xf32>
      %37 = tpu.iota {dimensions = array<i32: 0>} : vector<4x4xi32>
      %38 = tpu.iota {dimensions = array<i32: 1>} : vector<4x4xi32>
      %39 = arith.cmpi eq, %37, %38 : vector<4x4xi32>
      %cst_23 = arith.constant 0.000000e+00 : f32
      %40 = vector.broadcast %cst_23 : f32 to vector<4x4xf32>
      %41 = arith.select %39, %36, %40 : vector<4x4xi1>, vector<4x4xf32>
      %42 = vector.shape_cast %41 : vector<4x4xf32> to vector<1x4x4xf32>
      %cst_24 = arith.constant dense<0.000000e+00> : vector<1xf32>
      %43 = vector.multi_reduction <add>, %42, %cst_24 [1, 2] : vector<1x4x4xf32> to vector<1xf32>
      %44 = vector.shape_cast %43 : vector<1xf32> to vector<1x1x1xf32>
      %45 = vector.extract %44[0, 0, 0] : f32 from vector<1x1x1xf32>
      %cst_25 = arith.constant 0.000000e+00 : f32
      %46 = vector.broadcast %cst_25 : f32 to vector<1x8x128xf32>
      %47 = vector.broadcast %45 : f32 to vector<1x8x128xf32>
      %48 = arith.addf %47, %46 : vector<1x8x128xf32>
      %c0_26 = arith.constant 0 : index
      %c0_27 = arith.constant 0 : index
      %c0_28 = arith.constant 0 : index
      %49 = vector.load %arg7[%c0_26, %c0_27, %c0_28] : memref<1x8x128xf32, #tpu.memory_space<vmem>>, vector<1x8x128xf32>
      tpu.vector_store %arg7[%c0_26, %c0_27, %c0_28], %48 {strides = array<i32>} : memref<1x8x128xf32, #tpu.memory_space<vmem>>, vector<1x8x128xf32>,
    } else {
    }
    return
  }
  func.func @transform_0(%arg0: i32, %arg1: i32) -> (i32, i32) {
    %c1_i32 = arith.constant 1 : i32
    %0 = arith.muli %arg0, %c1_i32 : i32
    %1 = arith.addi %0, %arg1 : i32
    %c0_i32 = arith.constant 0 : i32
    %c0_i32_0 = arith.constant 0 : i32
    return %1, %c0_i32 : i32, i32
  }
  func.func @transform_1(%arg0: i32, %arg1: i32) -> (i32, i32) {
    %c1_i32 = arith.constant 1 : i32
    %0 = arith.muli %arg0, %c1_i32 : i32
    %1 = arith.addi %0, %arg1 : i32
    %c0_i32 = arith.constant 0 : i32
    %c0_i32_0 = arith.constant 0 : i32
    return %1, %c0_i32 : i32, i32
  }
  func.func @transform_2(%arg0: i32, %arg1: i32) -> (i32, i32) {
    %c1_i32 = arith.constant 1 : i32
    %0 = arith.muli %arg0, %c1_i32 : i32
    %1 = arith.addi %0, %arg1 : i32
    %c0_i32 = arith.constant 0 : i32
    %c0_i32_0 = arith.constant 0 : i32
    return %1, %c0_i32 : i32, i32
  }
  func.func @transform_3(%arg0: i32, %arg1: i32) -> (i32, i32) {
    %c1_i32 = arith.constant 1 : i32
    %0 = arith.muli %arg0, %c1_i32 : i32
    %1 = arith.addi %0, %arg1 : i32
    %c0_i32 = arith.constant 0 : i32
    %c0_i32_0 = arith.constant 0 : i32
    return %c0_i32, %1 : i32, i32
  }
  func.func @transform_4(%arg0: i32, %arg1: i32) -> (i32, i32) {
    %c0_i32 = arith.constant 0 : i32
    %c0_i32_0 = arith.constant 0 : i32
    %c0_i32_1 = arith.constant 0 : i32
    return %c0_i32, %c0_i32_0 : i32, i32
  }
  func.func @transform_5(%arg0: i32, %arg1: i32) -> (i32, i32, i32) {
    %c0_i32 = arith.constant 0 : i32
    %c0_i32_0 = arith.constant 0 : i32
    %c0_i32_1 = arith.constant 0 : i32
    return %arg0, %c0_i32, %c0_i32_0 : i32, i32, i32
  }
}

</mosaic_0001>

<llo_original>
// kernel: tpu_custom_call.1
$region0: #{tpu_custom_call.1}
  #allocation0 [shape = 'u32[]', space=smem, size = 0x4, offset = 0x4, fixed_abs, tag = 'smem constant byte address 0x4 - core index']
  #allocation1 [shape = 'u32[144,128]{1,0:T(1,128)}', space=vmem, size = 0x12000, scoped, tag = 'internal scratch']
  #allocation2 [shape = 'f32[4,4]{1,0:T(4,128)}', space=vmem, size = 0x800, scoped, tag = 'scratch operand']
  %s0 = inlined_call_operand.vmem [shape: f32[128,128], index: 0, kind: input, shape index: {}]
  %s1 = inlined_call_operand.hbm [shape: f32[128,128], index: 1, kind: input, shape index: {}]
  %s2 = inlined_call_operand.hbm [shape: f32[128,128], index: 2, kind: input, shape index: {}]
  %s3 = inlined_call_operand.vmem [shape: f32[4,128], index: 3, kind: input, shape index: {}]
  %s4 = inlined_call_operand.vmem [shape: f32[128,4], index: 4, kind: input, shape index: {}]
  %s5 = inlined_call_operand.hbm [shape: f32[1,8,128], index: 5, kind: output, shape index: {}]
  %s6 = sld [smem:[#allocation0]]
  $region46: #{tpu_custom_call.1} parent=0
    _
  %s8 = ssub.s32 1, %s6
  %s9 = scalar_select 0, %s8, %s6
  $region1: #{tpu_custom_call.1} parent=0
    #allocation3 [shape = 'u8[65536]{0}', space=vmem, size = 0x10000, scoped, tag = 'input window, operand 1, single buffered']
    #allocation4 [shape = 's32[1]{0}', space=sflag, size = 0x4, scoped, tag = 'scoped memory for tpu_custom_call.1']
    #allocation5 [shape = 's32[1]{0}', space=sflag, size = 0x4, scoped, tag = 'scoped memory for tpu_custom_call.1']
    #allocation6 [shape = 'u8[65536]{0}', space=vmem, size = 0x10000, scoped, tag = 'input window, operand 2, single buffered']
    #allocation7 [shape = 's32[1]{0}', space=sflag, size = 0x4, scoped, tag = 'scoped memory for tpu_custom_call.1']
    #allocation8 [shape = 'u8[4096]{0}', space=vmem, size = 0x1000, scoped, tag = 'output window, operand 0, single buffered']
    %10 = vsyncpa [#allocation4], 0
    %11 = vsyncpa [#allocation7], 0
    %12 = vsyncpa [#allocation5], 0
    // Predicated region
    $region2: #{tpu_custom_call.1} parent=1 // pred_check
      _
    $region3: #{tpu_custom_call.1} parent=1 // pred_check_branch
      %14 = sbr.rel (0) target = $region5
    $region4: #{tpu_custom_call.1} parent=1 // pred_region
      %s15 = sadd.s32 0, 0
      %s16 = smul.u32 16, %s15
      %p17 = scmp.lt.s32.totalorder %s16, 15
      %s18 = scalar_select %p17, %s16, 15
      %s19 = smul.addr %s18, 8
      %s20 = scalar_lea.vmem %s0, %s19
      %s21 = sadd.s32 0, 0
      %s22 = smul.u32 16, %s21
    $region5: #{tpu_custom_call.1} parent=1 // pred_fallthru
      _
    // Predicated region
    $region6: #{tpu_custom_call.1} parent=1 // pred_check
      _
    $region7: #{tpu_custom_call.1} parent=1 // pred_check_branch
      %24 = sbr.rel (0) target = $region9
    $region8: #{tpu_custom_call.1} parent=1 // pred_region
      %s25 = sadd.s32 0, 0
      %s26 = smul.u32 16, %s25
      %s28 = ssub.s32 2048, 2048
      %29 = vsyncadd [#allocation4], %s28
      %s30 = smul.addr %s26, 128
      %s31 = scalar_lea.hbm %s1, %s30
      %s32 = sshll.u32 [#allocation3], 4
      %s33 = int_to_ptr.vmem [resolvable:$true] %s32
      %38 = dma.hbm_to_vmem [thread:$0]  %s31, 2048, %s33, [#allocation4], 128, 128, 8
    $region9: #{tpu_custom_call.1} parent=1 // pred_fallthru
      _
    // Predicated region
    $region10: #{tpu_custom_call.1} parent=1 // pred_check
      _
    $region11: #{tpu_custom_call.1} parent=1 // pred_check_branch
      %40 = sbr.rel (0) target = $region13
    $region12: #{tpu_custom_call.1} parent=1 // pred_region
      %s41 = sadd.s32 0, 0
      %s42 = smul.u32 16, %s41
      %s44 = ssub.s32 2048, 2048
      %45 = vsyncadd [#allocation7], %s44
      %s46 = smul.addr %s42, 128
      %s47 = scalar_lea.hbm %s2, %s46
      %s48 = sshll.u32 [#allocation6], 4
      %s49 = int_to_ptr.vmem [resolvable:$true] %s48
      %54 = dma.hbm_to_vmem [thread:$0]  %s47, 2048, %s49, [#allocation7], 128, 128, 8
    $region13: #{tpu_custom_call.1} parent=1 // pred_fallthru
      _
    // Predicated region
    $region14: #{tpu_custom_call.1} parent=1 // pred_check
      _
    $region15: #{tpu_custom_call.1} parent=1 // pred_check_branch
      %56 = sbr.rel (0) target = $region17
    $region16: #{tpu_custom_call.1} parent=1 // pred_region
      %s57 = sadd.s32 0, 0
      %p58 = scmp.lt.s32.totalorder %s57, 0
      %s59 = scalar_select %p58, %s57, 0
      %s60 = smul.addr %s59, 4
      %s61 = scalar_lea.vmem %s3, %s60
      %s62 = sadd.s32 0, 0
    $region17: #{tpu_custom_call.1} parent=1 // pred_fallthru
      _
    // Predicated region
    $region18: #{tpu_custom_call.1} parent=1 // pred_check
      _
    $region19: #{tpu_custom_call.1} parent=1 // pred_check_branch
      %64 = sbr.rel (0) target = $region21
    $region20: #{tpu_custom_call.1} parent=1 // pred_region
      _
    $region21: #{tpu_custom_call.1} parent=1 // pred_fallthru
      _
    // Predicated region
    $region22: #{tpu_custom_call.1} parent=1 // pred_check
      _
    $region23: #{tpu_custom_call.1} parent=1 // pred_check_branch
      %66 = sbr.rel (0) target = $region25
    $region24: #{tpu_custom_call.1} parent=1 // pred_region
      %67 = dma.done [#allocation4], 2048
    $region25: #{tpu_custom_call.1} parent=1 // pred_fallthru
      _
    // Predicated region
    $region26: #{tpu_custom_call.1} parent=1 // pred_check
      _
    $region27: #{tpu_custom_call.1} parent=1 // pred_check_branch
      %69 = sbr.rel (0) target = $region29
    $region28: #{tpu_custom_call.1} parent=1 // pred_region
      %70 = dma.done [#allocation7], 2048
    $region29: #{tpu_custom_call.1} parent=1 // pred_fallthru
      _
    %s71 = sadd.s32 0, 0
    %s72 = smul.u32 16, %s71
    %p73 = scmp.lt.s32.totalorder %s72, 15
    %s74 = scalar_select %p73, %s72, 15
    %s75 = smul.addr %s74, 8
    %s76 = scalar_lea.vmem %s0, %s75
    %s77 = sadd.s32 0, 0
    %p78 = scmp.lt.s32.totalorder %s77, 0
    %s79 = scalar_select %p78, %s77, 0
    %s80 = smul.addr %s79, 4
    %s81 = scalar_lea.vmem %s3, %s80
    %s82 = sadd.s32 0, 0
    %s83 = smul.u32 16, %s82
    %p84 = scmp.lt.s32.totalorder %s83, 15
    %s85 = scalar_select %p84, %s83, 15
    %s86 = smul.addr %s85, 8
    %s87 = scalar_lea.vmem %s0, %s86
    %s88 = sadd.s32 0, 0
    %s89 = smul.u32 16, %s88
    %s90 = sadd.s32 0, 0
    %s91 = smul.u32 16, %s90
    %s92 = sadd.s32 0, 0
    %s93 = smul.u32 16, %s92
    %s94 = sadd.s32 0, 0
    %p95 = scmp.lt.s32.totalorder %s94, 0
    %s96 = scalar_select %p95, %s94, 0
    %s97 = smul.addr %s96, 4
    %s98 = scalar_lea.vmem %s3, %s97
    %s99 = sadd.s32 0, 0
    %p100 = scmp.eq.s32.totalorder 0, 0
    // Predicated region
    $region30: #{tpu_custom_call.1} parent=1 // pred_check
      %p101 = pneg %p100
    $region31: #{tpu_custom_call.1} parent=1 // pred_check_branch
      %103 = sbr.rel (%p101) target = $region33
    $region32: #{tpu_custom_call.1} parent=1 // pred_region
      %vm104 = vcmask 27648
      %105 = vst.msk [vmem:[#allocation2] sm:$0xf] %vm104, 0.0
    $region33: #{tpu_custom_call.1} parent=1 // pred_fallthru
      _
    %v106 = vld [vmem:[%s87] sm:$0xff]
    %v107 = vld [vmem:[%s87 + $0x8] sm:$0xff]
    %v108 = vld [vmem:[%s87 + $0x10] sm:$0xff]
    %v109 = vld [vmem:[%s87 + $0x18] sm:$0xff]
    %v110 = vld [vmem:[%s87 + $0x20] sm:$0xff]
    %v111 = vld [vmem:[%s87 + $0x28] sm:$0xff]
    %v112 = vld [vmem:[%s87 + $0x30] sm:$0xff]
    %v113 = vld [vmem:[%s87 + $0x38] sm:$0xff]
    %v114 = vld [vmem:[%s87 + $0x40] sm:$0xff]
    %v115 = vld [vmem:[%s87 + $0x48] sm:$0xff]
    %v116 = vld [vmem:[%s87 + $0x50] sm:$0xff]
    %v117 = vld [vmem:[%s87 + $0x58] sm:$0xff]
    %v118 = vld [vmem:[%s87 + $0x60] sm:$0xff]
    %v119 = vld [vmem:[%s87 + $0x68] sm:$0xff]
    %v120 = vld [vmem:[%s87 + $0x70] sm:$0xff]
    %v121 = vld [vmem:[%s87 + $0x78] sm:$0xff]
    %v122 = vld [vmem:[#allocation3] sm:$0xff]
    %v123 = vld [vmem:[#allocation3 + $0x8] sm:$0xff]
    %v124 = vld [vmem:[#allocation3 + $0x10] sm:$0xff]
    %v125 = vld [vmem:[#allocation3 + $0x18] sm:$0xff]
    %v126 = vld [vmem:[#allocation3 + $0x20] sm:$0xff]
    %v127 = vld [vmem:[#allocation3 + $0x28] sm:$0xff]
    %v128 = vld [vmem:[#allocation3 + $0x30] sm:$0xff]
    %v129 = vld [vmem:[#allocation3 + $0x38] sm:$0xff]
    %v130 = vld [vmem:[#allocation3 + $0x40] sm:$0xff]
    %v131 = vld [vmem:[#allocation3 + $0x48] sm:$0xff]
    %v132 = vld [vmem:[#allocation3 + $0x50] sm:$0xff]
    %v133 = vld [vmem:[#allocation3 + $0x58] sm:$0xff]
    %v134 = vld [vmem:[#allocation3 + $0x60] sm:$0xff]
    %v135 = vld [vmem:[#allocation3 + $0x68] sm:$0xff]
    %v136 = vld [vmem:[#allocation3 + $0x70] sm:$0xff]
    %v137 = vld [vmem:[#allocation3 + $0x78] sm:$0xff]
    %v138 = vld [vmem:[#allocation6] sm:$0xff]
    %v139 = vld [vmem:[#allocation6 + $0x8] sm:$0xff]
    %v140 = vld [vmem:[#allocation6 + $0x10] sm:$0xff]
    %v141 = vld [vmem:[#allocation6 + $0x18] sm:$0xff]
    %v142 = vld [vmem:[#allocation6 + $0x20] sm:$0xff]
    %v143 = vld [vmem:[#allocation6 + $0x28] sm:$0xff]
    %v144 = vld [vmem:[#allocation6 + $0x30] sm:$0xff]
    %v145 = vld [vmem:[#allocation6 + $0x38] sm:$0xff]
    %v146 = vld [vmem:[#allocation6 + $0x40] sm:$0xff]
    %v147 = vld [vmem:[#allocation6 + $0x48] sm:$0xff]
    %v148 = vld [vmem:[#allocation6 + $0x50] sm:$0xff]
    %v149 = vld [vmem:[#allocation6 + $0x58] sm:$0xff]
    %v150 = vld [vmem:[#allocation6 + $0x60] sm:$0xff]
    %v151 = vld [vmem:[#allocation6 + $0x68] sm:$0xff]
    %v152 = vld [vmem:[#allocation6 + $0x70] sm:$0xff]
    %v153 = vld [vmem:[#allocation6 + $0x78] sm:$0xff]
    %v154 = vsub.f32 %v122, %v138
    %v155 = vsub.f32 %v123, %v139
    %v156 = vsub.f32 %v124, %v140
    %v157 = vsub.f32 %v125, %v141
    %v158 = vsub.f32 %v126, %v142
    %v159 = vsub.f32 %v127, %v143
    %v160 = vsub.f32 %v128, %v144
    %v161 = vsub.f32 %v129, %v145
    %v162 = vsub.f32 %v130, %v146
    %v163 = vsub.f32 %v131, %v147
    %v164 = vsub.f32 %v132, %v148
    %v165 = vsub.f32 %v133, %v149
    %v166 = vsub.f32 %v134, %v150
    %v167 = vsub.f32 %v135, %v151
    %v168 = vsub.f32 %v136, %v152
    %v169 = vsub.f32 %v137, %v153
    %v170 = vadd.f32 %v122, %v138
    %v171 = vadd.f32 %v123, %v139
    %v172 = vadd.f32 %v124, %v140
    %v173 = vadd.f32 %v125, %v141
    %v174 = vadd.f32 %v126, %v142
    %v175 = vadd.f32 %v127, %v143
    %v176 = vadd.f32 %v128, %v144
    %v177 = vadd.f32 %v129, %v145
    %v178 = vadd.f32 %v130, %v146
    %v179 = vadd.f32 %v131, %v147
    %v180 = vadd.f32 %v132, %v148
    %v181 = vadd.f32 %v133, %v149
    %v182 = vadd.f32 %v134, %v150
    %v183 = vadd.f32 %v135, %v151
    %v184 = vadd.f32 %v136, %v152
    %v185 = vadd.f32 %v137, %v153
    %v186 = vmul.f32 %v106, 2.0
    %v187 = vmul.f32 %v107, 2.0
    %v188 = vmul.f32 %v108, 2.0
    %v189 = vmul.f32 %v109, 2.0
    %v190 = vmul.f32 %v110, 2.0
    %v191 = vmul.f32 %v111, 2.0
    %v192 = vmul.f32 %v112, 2.0
    %v193 = vmul.f32 %v113, 2.0
    %v194 = vmul.f32 %v114, 2.0
    %v195 = vmul.f32 %v115, 2.0
    %v196 = vmul.f32 %v116, 2.0
    %v197 = vmul.f32 %v117, 2.0
    %v198 = vmul.f32 %v118, 2.0
    %v199 = vmul.f32 %v119, 2.0
    %v200 = vmul.f32 %v120, 2.0
    %v201 = vmul.f32 %v121, 2.0
    %v202 = vsub.f32 %v170, %v186
    %v203 = vsub.f32 %v171, %v187
    %v204 = vsub.f32 %v172, %v188
    %v205 = vsub.f32 %v173, %v189
    %v206 = vsub.f32 %v174, %v190
    %v207 = vsub.f32 %v175, %v191
    %v208 = vsub.f32 %v176, %v192
    %v209 = vsub.f32 %v177, %v193
    %v210 = vsub.f32 %v178, %v194
    %v211 = vsub.f32 %v179, %v195
    %v212 = vsub.f32 %v180, %v196
    %v213 = vsub.f32 %v181, %v197
    %v214 = vsub.f32 %v182, %v198
    %v215 = vsub.f32 %v183, %v199
    %v216 = vsub.f32 %v184, %v200
    %v217 = vsub.f32 %v185, %v201
    %v218 = vmul.f32 %v154, %v202
    %v219 = vmul.f32 %v155, %v203
    %v220 = vmul.f32 %v156, %v204
    %v221 = vmul.f32 %v157, %v205
    %v222 = vmul.f32 %v158, %v206
    %v223 = vmul.f32 %v159, %v207
    %v224 = vmul.f32 %v160, %v208
    %v225 = vmul.f32 %v161, %v209
    %v226 = vmul.f32 %v162, %v210
    %v227 = vmul.f32 %v163, %v211
    %v228 = vmul.f32 %v164, %v212
    %v229 = vmul.f32 %v165, %v213
    %v230 = vmul.f32 %v166, %v214
    %v231 = vmul.f32 %v167, %v215
    %v232 = vmul.f32 %v168, %v216
    %v233 = vmul.f32 %v169, %v217
    %v234 = vld [vmem:[%s4] sm:$0xff]
    %v235 = vld [vmem:[%s4 + $0x8] sm:$0xff]
    %v236 = vld [vmem:[%s4 + $0x10] sm:$0xff]
    %v237 = vld [vmem:[%s4 + $0x18] sm:$0xff]
    %v238 = vld [vmem:[%s4 + $0x20] sm:$0xff]
    %v239 = vld [vmem:[%s4 + $0x28] sm:$0xff]
    %v240 = vld [vmem:[%s4 + $0x30] sm:$0xff]
    %v241 = vld [vmem:[%s4 + $0x38] sm:$0xff]
    %v242 = vld [vmem:[%s4 + $0x40] sm:$0xff]
    %v243 = vld [vmem:[%s4 + $0x48] sm:$0xff]
    %v244 = vld [vmem:[%s4 + $0x50] sm:$0xff]
    %v245 = vld [vmem:[%s4 + $0x58] sm:$0xff]
    %v246 = vld [vmem:[%s4 + $0x60] sm:$0xff]
    %v247 = vld [vmem:[%s4 + $0x68] sm:$0xff]
    %v248 = vld [vmem:[%s4 + $0x70] sm:$0xff]
    %v249 = vld [vmem:[%s4 + $0x78] sm:$0xff]
    %250 = vmatprep.subr.mxu0 0.0
    %251 = vmatpush1.msra.mxu0 %v234
    %252 = vmatprep.subr.mxu0 0.0
    %253 = vmatpush1.msra.mxu0 %v235
    %254 = vmatprep.subr.mxu0 0.0
    %255 = vmatpush1.msra.mxu0 %v236
    %256 = vmatprep.subr.mxu0 0.0
    %257 = vmatpush1.msra.mxu0 %v237
    %258 = vmatprep.subr.mxu0 0.0
    %259 = vmatpush1.msra.mxu0 %v238
    %260 = vmatprep.subr.mxu0 0.0
    %261 = vmatpush1.msra.mxu0 %v239
    %262 = vmatprep.subr.mxu0 0.0
    %263 = vmatpush1.msra.mxu0 %v240
    %264 = vmatprep.subr.mxu0 0.0
    %265 = vmatpush1.msra.mxu0 %v241
    %266 = vmatprep.subr.mxu0 0.0
    %267 = vmatpush1.msra.mxu0 %v242
    %268 = vmatprep.subr.mxu0 0.0
    %269 = vmatpush1.msra.mxu0 %v243
    %270 = vmatprep.subr.mxu0 0.0
    %271 = vmatpush1.msra.mxu0 %v244
    %272 = vmatprep.subr.mxu0 0.0
    %273 = vmatpush1.msra.mxu0 %v245
    %274 = vmatprep.subr.mxu0 0.0
    %275 = vmatpush1.msra.mxu0 %v246
    %276 = vmatprep.subr.mxu0 0.0
    %277 = vmatpush1.msra.mxu0 %v247
    %278 = vmatprep.subr.mxu0 0.0
    %279 = vmatpush1.msra.mxu0 %v248
    %280 = vmatprep.subr.mxu0 0.0
    %281 = vmatpush1.msra.mxu0 %v249
    %282 = vmatprep.subr.mxu0 0.0
    %283 = vmatpush1.msra.mxu0 0.0
    %284 = vmatprep.subr.mxu0 0.0
    %285 = vmatpush1.msra.mxu0 0.0
    %286 = vmatprep.subr.mxu0 0.0
    %287 = vmatpush1.msra.mxu0 0.0
    %288 = vmatprep.subr.mxu0 0.0
    %289 = vmatpush1.msra.mxu0 0.0
    %290 = vmatprep.subr.mxu0 0.0
    %291 = vmatpush1.msra.mxu0 0.0
    %292 = vmatprep.subr.mxu0 0.0
    %293 = vmatpush1.msra.mxu0 0.0
    %294 = vmatprep.subr.mxu0 0.0
    %295 = vmatpush1.msra.mxu0 0.0
    %296 = vmatprep.subr.mxu0 0.0
    %297 = vmatpush1.msra.mxu0 0.0
    %298 = vmatprep.subr.mxu0 0.0
    %299 = vmatpush1.msra.mxu0 0.0
    %300 = vmatprep.subr.mxu0 0.0
    %301 = vmatpush1.msra.mxu0 0.0
    %302 = vmatprep.subr.mxu0 0.0
    %303 = vmatpush1.msra.mxu0 0.0
    %304 = vmatprep.subr.mxu0 0.0
    %305 = vmatpush1.msra.mxu0 0.0
    %306 = vmatprep.subr.mxu0 0.0
    %307 = vmatpush1.msra.mxu0 0.0
    %308 = vmatprep.subr.mxu0 0.0
    %309 = vmatpush1.msra.mxu0 0.0
    %310 = vmatprep.subr.mxu0 0.0
    %311 = vmatpush1.msra.mxu0 0.0
    %312 = vmatprep.subr.mxu0 0.0
    %313 = vmatpush1.msra.mxu0 0.0
    %314 = vmatprep.mubr.f32.mxu0 0.0
    %315 = vmatmul.mubr.f32.gmra.mrb[0].mxu0 %v218
    %v316 = vpop.f32.mrb[0].mxu0
    %v317 = vadd.f32 0.0, %v316
    %v318 = vpop.f32.mrb[0].mxu0
    %319 = vmatprep.mubr.f32.mxu0 0.0
    %320 = vmatmul.mubr.f32.gmra.mrb[0].mxu0 %v219
    %v321 = vpop.f32.mrb[0].mxu0
    %v322 = vadd.f32 0.0, %v321
    %v323 = vpop.f32.mrb[0].mxu0
    %324 = vmatprep.mubr.f32.mxu0 0.0
    %325 = vmatmul.mubr.f32.gmra.mrb[0].mxu0 %v220
    %v326 = vpop.f32.mrb[0].mxu0
    %v327 = vadd.f32 0.0, %v326
    %v328 = vpop.f32.mrb[0].mxu0
    %329 = vmatprep.mubr.f32.mxu0 0.0
    %330 = vmatmul.mubr.f32.gmra.mrb[0].mxu0 %v221
    %v331 = vpop.f32.mrb[0].mxu0
    %v332 = vadd.f32 0.0, %v331
    %v333 = vpop.f32.mrb[0].mxu0
    %334 = vmatprep.mubr.f32.mxu0 0.0
    %335 = vmatmul.mubr.f32.gmra.mrb[0].mxu0 %v222
    %v336 = vpop.f32.mrb[0].mxu0
    %v337 = vadd.f32 0.0, %v336
    %v338 = vpop.f32.mrb[0].mxu0
    %339 = vmatprep.mubr.f32.mxu0 0.0
    %340 = vmatmul.mubr.f32.gmra.mrb[0].mxu0 %v223
    %v341 = vpop.f32.mrb[0].mxu0
    %v342 = vadd.f32 0.0, %v341
    %v343 = vpop.f32.mrb[0].mxu0
    %344 = vmatprep.mubr.f32.mxu0 0.0
    %345 = vmatmul.mubr.f32.gmra.mrb[0].mxu0 %v224
    %v346 = vpop.f32.mrb[0].mxu0
    %v347 = vadd.f32 0.0, %v346
    %v348 = vpop.f32.mrb[0].mxu0
    %349 = vmatprep.mubr.f32.mxu0 0.0
    %350 = vmatmul.mubr.f32.gmra.mrb[0].mxu0 %v225
    %v351 = vpop.f32.mrb[0].mxu0
    %v352 = vadd.f32 0.0, %v351
    %v353 = vpop.f32.mrb[0].mxu0
    %354 = vmatprep.mubr.f32.mxu0 0.0
    %355 = vmatmul.mubr.f32.gmra.mrb[0].mxu0 %v226
    %v356 = vpop.f32.mrb[0].mxu0
    %v357 = vadd.f32 0.0, %v356
    %v358 = vpop.f32.mrb[0].mxu0
    %359 = vmatprep.mubr.f32.mxu0 0.0
    %360 = vmatmul.mubr.f32.gmra.mrb[0].mxu0 %v227
    %v361 = vpop.f32.mrb[0].mxu0
    %v362 = vadd.f32 0.0, %v361
    %v363 = vpop.f32.mrb[0].mxu0
    %364 = vmatprep.mubr.f32.mxu0 0.0
    %365 = vmatmul.mubr.f32.gmra.mrb[0].mxu0 %v228
    %v366 = vpop.f32.mrb[0].mxu0
    %v367 = vadd.f32 0.0, %v366
    %v368 = vpop.f32.mrb[0].mxu0
    %369 = vmatprep.mubr.f32.mxu0 0.0
    %370 = vmatmul.mubr.f32.gmra.mrb[0].mxu0 %v229
    %v371 = vpop.f32.mrb[0].mxu0
    %v372 = vadd.f32 0.0, %v371
    %v373 = vpop.f32.mrb[0].mxu0
    %374 = vmatprep.mubr.f32.mxu0 0.0
    %375 = vmatmul.mubr.f32.gmra.mrb[0].mxu0 %v230
    %v376 = vpop.f32.mrb[0].mxu0
    %v377 = vadd.f32 0.0, %v376
    %v378 = vpop.f32.mrb[0].mxu0
    %379 = vmatprep.mubr.f32.mxu0 0.0
    %380 = vmatmul.mubr.f32.gmra.mrb[0].mxu0 %v231
    %v381 = vpop.f32.mrb[0].mxu0
    %v382 = vadd.f32 0.0, %v381
    %v383 = vpop.f32.mrb[0].mxu0
    %384 = vmatprep.mubr.f32.mxu0 0.0
    %385 = vmatmul.mubr.f32.gmra.mrb[0].mxu0 %v232
    %v386 = vpop.f32.mrb[0].mxu0
    %v387 = vadd.f32 0.0, %v386
    %v388 = vpop.f32.mrb[0].mxu0
    %389 = vmatprep.mubr.f32.mxu0 0.0
    %390 = vmatmul.mubr.f32.gmra.mrb[0].mxu0 %v233
    %v391 = vpop.f32.mrb[0].mxu0
    %v392 = vadd.f32 0.0, %v391
    %v393 = vpop.f32.mrb[0].mxu0
    %394 = vdwg.mxu0
    %s395 = sadd.s32 0, 0
    %v396 = vlaneseq
    %v397 = vshrl.u32 %v396, 7
    %v398 = vadd.s32 %v397, 8
    %v399 = vadd.s32 %v397, 16
    %v400 = vadd.s32 %v397, 24
    %v401 = vadd.s32 %v397, 32
    %v402 = vadd.s32 %v397, 40
    %v403 = vadd.s32 %v397, 48
    %v404 = vadd.s32 %v397, 56
    %v405 = vadd.s32 %v397, 64
    %v406 = vadd.s32 %v397, 72
    %v407 = vadd.s32 %v397, 80
    %v408 = vadd.s32 %v397, 88
    %v409 = vadd.s32 %v397, 96
    %v410 = vadd.s32 %v397, 104
    %v411 = vadd.s32 %v397, 112
    %v412 = vadd.s32 %v397, 120
    %s413 = smul.u32 %s395, 128
    %v414 = vstv %s413
    %v415 = vadd.s32 %v397, %v414
    %v416 = vadd.s32 %v398, %v414
    %v417 = vadd.s32 %v399, %v414
    %v418 = vadd.s32 %v400, %v414
    %v419 = vadd.s32 %v401, %v414
    %v420 = vadd.s32 %v402, %v414
    %v421 = vadd.s32 %v403, %v414
    %v422 = vadd.s32 %v404, %v414
    %v423 = vadd.s32 %v405, %v414
    %v424 = vadd.s32 %v406, %v414
    %v425 = vadd.s32 %v407, %v414
    %v426 = vadd.s32 %v408, %v414
    %v427 = vadd.s32 %v409, %v414
    %v428 = vadd.s32 %v410, %v414
    %v429 = vadd.s32 %v411, %v414
    %v430 = vadd.s32 %v412, %v414
    %vm431 = vcmp.lt.s32.totalorder %v415, 2
    %vm432 = vcmp.lt.s32.totalorder %v416, 2
    %vm433 = vcmp.lt.s32.totalorder %v417, 2
    %vm434 = vcmp.lt.s32.totalorder %v418, 2
    %vm435 = vcmp.lt.s32.totalorder %v419, 2
    %vm436 = vcmp.lt.s32.totalorder %v420, 2
    %vm437 = vcmp.lt.s32.totalorder %v421, 2
    %vm438 = vcmp.lt.s32.totalorder %v422, 2
    %vm439 = vcmp.lt.s32.totalorder %v423, 2
    %vm440 = vcmp.lt.s32.totalorder %v424, 2
    %vm441 = vcmp.lt.s32.totalorder %v425, 2
    %vm442 = vcmp.lt.s32.totalorder %v426, 2
    %vm443 = vcmp.lt.s32.totalorder %v427, 2
    %vm444 = vcmp.lt.s32.totalorder %v428, 2
    %vm445 = vcmp.lt.s32.totalorder %v429, 2
    %vm446 = vcmp.lt.s32.totalorder %v430, 2
    %v447 = vsel %vm431, %v317, 0.0
    %v448 = vsel %vm432, %v322, 0.0
    %v449 = vsel %vm433, %v327, 0.0
    %v450 = vsel %vm434, %v332, 0.0
    %v451 = vsel %vm435, %v337, 0.0
    %v452 = vsel %vm436, %v342, 0.0
    %v453 = vsel %vm437, %v347, 0.0
    %v454 = vsel %vm438, %v352, 0.0
    %v455 = vsel %vm439, %v357, 0.0
    %v456 = vsel %vm440, %v362, 0.0
    %v457 = vsel %vm441, %v367, 0.0
    %v458 = vsel %vm442, %v372, 0.0
    %v459 = vsel %vm443, %v377, 0.0
    %v460 = vsel %vm444, %v382, 0.0
    %v461 = vsel %vm445, %v387, 0.0
    %v462 = vsel %vm446, %v392, 0.0
    %v463 = vadd.f32 %v447, 0.5
    %v464 = vadd.f32 %v448, 0.5
    %v465 = vadd.f32 %v449, 0.5
    %v466 = vadd.f32 %v450, 0.5
    %v467 = vadd.f32 %v451, 0.5
    %v468 = vadd.f32 %v452, 0.5
    %v469 = vadd.f32 %v453, 0.5
    %v470 = vadd.f32 %v454, 0.5
    %v471 = vadd.f32 %v455, 0.5
    %v472 = vadd.f32 %v456, 0.5
    %v473 = vadd.f32 %v457, 0.5
    %v474 = vadd.f32 %v458, 0.5
    %v475 = vadd.f32 %v459, 0.5
    %v476 = vadd.f32 %v460, 0.5
    %v477 = vadd.f32 %v461, 0.5
    %v478 = vadd.f32 %v462, 0.5
    %v479 = vmax.f32 %v463, 0.0
    %v480 = vmax.f32 %v464, 0.0
    %v481 = vmax.f32 %v465, 0.0
    %v482 = vmax.f32 %v466, 0.0
    %v483 = vmax.f32 %v467, 0.0
    %v484 = vmax.f32 %v468, 0.0
    %v485 = vmax.f32 %v469, 0.0
    %v486 = vmax.f32 %v470, 0.0
    %v487 = vmax.f32 %v471, 0.0
    %v488 = vmax.f32 %v472, 0.0
    %v489 = vmax.f32 %v473, 0.0
    %v490 = vmax.f32 %v474, 0.0
    %v491 = vmax.f32 %v475, 0.0
    %v492 = vmax.f32 %v476, 0.0
    %v493 = vmax.f32 %v477, 0.0
    %v494 = vmax.f32 %v478, 0.0
    %v495 = vld [vmem:[#allocation2] sm:$0xf]
    %v496 = vld [vmem:[%s98] sm:$0xf]
    %497 = vmatprep.subr.mxu0 0.0
    %498 = vmatpush1.msra.mxu0 %v479
    %499 = vmatprep.subr.mxu0 0.0
    %500 = vmatpush1.msra.mxu0 %v480
    %501 = vmatprep.subr.mxu0 0.0
    %502 = vmatpush1.msra.mxu0 %v481
    %503 = vmatprep.subr.mxu0 0.0
    %504 = vmatpush1.msra.mxu0 %v482
    %505 = vmatprep.subr.mxu0 0.0
    %506 = vmatpush1.msra.mxu0 %v483
    %507 = vmatprep.subr.mxu0 0.0
    %508 = vmatpush1.msra.mxu0 %v484
    %509 = vmatprep.subr.mxu0 0.0
    %510 = vmatpush1.msra.mxu0 %v485
    %511 = vmatprep.subr.mxu0 0.0
    %512 = vmatpush1.msra.mxu0 %v486
    %513 = vmatprep.subr.mxu0 0.0
    %514 = vmatpush1.msra.mxu0 %v487
    %515 = vmatprep.subr.mxu0 0.0
    %516 = vmatpush1.msra.mxu0 %v488
    %517 = vmatprep.subr.mxu0 0.0
    %518 = vmatpush1.msra.mxu0 %v489
    %519 = vmatprep.subr.mxu0 0.0
    %520 = vmatpush1.msra.mxu0 %v490
    %521 = vmatprep.subr.mxu0 0.0
    %522 = vmatpush1.msra.mxu0 %v491
    %523 = vmatprep.subr.mxu0 0.0
    %524 = vmatpush1.msra.mxu0 %v492
    %525 = vmatprep.subr.mxu0 0.0
    %526 = vmatpush1.msra.mxu0 %v493
    %527 = vmatprep.subr.mxu0 0.0
    %528 = vmatpush1.msra.mxu0 %v494
    %529 = vmatprep.subr.mxu0 0.0
    %530 = vmatpush1.msra.mxu0 0.0
    %531 = vmatprep.subr.mxu0 0.0
    %532 = vmatpush1.msra.mxu0 0.0
    %533 = vmatprep.subr.mxu0 0.0
    %534 = vmatpush1.msra.mxu0 0.0
    %535 = vmatprep.subr.mxu0 0.0
    %536 = vmatpush1.msra.mxu0 0.0
    %537 = vmatprep.subr.mxu0 0.0
    %538 = vmatpush1.msra.mxu0 0.0
    %539 = vmatprep.subr.mxu0 0.0
    %540 = vmatpush1.msra.mxu0 0.0
    %541 = vmatprep.subr.mxu0 0.0
    %542 = vmatpush1.msra.mxu0 0.0
    %543 = vmatprep.subr.mxu0 0.0
    %544 = vmatpush1.msra.mxu0 0.0
    %545 = vmatprep.subr.mxu0 0.0
    %546 = vmatpush1.msra.mxu0 0.0
    %547 = vmatprep.subr.mxu0 0.0
    %548 = vmatpush1.msra.mxu0 0.0
    %549 = vmatprep.subr.mxu0 0.0
    %550 = vmatpush1.msra.mxu0 0.0
    %551 = vmatprep.subr.mxu0 0.0
    %552 = vmatpush1.msra.mxu0 0.0
    %553 = vmatprep.subr.mxu0 0.0
    %554 = vmatpush1.msra.mxu0 0.0
    %555 = vmatprep.subr.mxu0 0.0
    %556 = vmatpush1.msra.mxu0 0.0
    %557 = vmatprep.subr.mxu0 0.0
    %558 = vmatpush1.msra.mxu0 0.0
    %559 = vmatprep.subr.mxu0 0.0
    %560 = vmatpush1.msra.mxu0 0.0
    %561 = vmatprep.mubr.f32.mxu0 0.0
    %562 = vmatmul.mubr.f32.gmra.mrb[0].mxu0 %v496
    %v563 = vpop.f32.mrb[0].mxu0
    %v564 = vadd.f32 0.0, %v563
    %v565 = vpop.f32.mrb[0].mxu0
    %566 = vdwg.mxu0
    %v567 = vadd.f32 %v495, %v564
    %vm568 = vcmask 27648
    %569 = vst.msk [vmem:[#allocation2] sm:$0xf] %vm568, %v567
    // Predicated region
    $region34: #{tpu_custom_call.1} parent=1 // pred_check
      %p570 = pneg %p100
    $region35: #{tpu_custom_call.1} parent=1 // pred_check_branch
      %572 = sbr.rel (%p570) target = $region37
    $region36: #{tpu_custom_call.1} parent=1 // pred_region
      %v573 = vld [vmem:[#allocation2] sm:$0xf]
      %v574 = vlaneseq
      %v575 = vand.u32 %v574, 127
      %vm576 = vcmp.eq.s32.totalorder %v397, %v575
      %v577 = vsel %vm576, %v573, 0.0
      %v578 = vsel %vm568, %v577, 0.0
      %579 = vadd.xlane.f32.xlu0 %v578
      %v580 = vpop.xlane.xlu0 %579
      %v581 = vrot.slane %v580, 4
      %v582 = vadd.f32 %v580, %v581
      %v583 = vrot.slane %v582, 2
      %v584 = vadd.f32 %v582, %v583
      %v585 = vrot.slane %v584, 1
      %v586 = vadd.f32 %v584, %v585
      %s587 = vtos %v586
      %v588 = vstv %s587
      %v589 = vadd.f32 %v588, 0.0
      %590 = vst [vmem:[#allocation8] sm:$0xff] %v589
    $region37: #{tpu_custom_call.1} parent=1 // pred_fallthru
      _
    // Predicated region
    $region38: #{tpu_custom_call.1} parent=1 // pred_check
      _
    $region39: #{tpu_custom_call.1} parent=1 // pred_check_branch
      %592 = sbr.rel (0) target = $region41
    $region40: #{tpu_custom_call.1} parent=1 // pred_region
      %s594 = ssub.s32 128, 128
      %595 = vsyncadd [#allocation5], %s594
      %s597 = sshll.u32 [#allocation8], 4
      %s598 = int_to_ptr.vmem [resolvable:$true] %s597
      %600 = dma.vmem_to_hbm [thread:$0]  %s598, 128, %s5, [#allocation5]
    $region41: #{tpu_custom_call.1} parent=1 // pred_fallthru
      _
    // Predicated region
    $region42: #{tpu_custom_call.1} parent=1 // pred_check
      _
    $region43: #{tpu_custom_call.1} parent=1 // pred_check_branch
      %602 = sbr.rel (0) target = $region45
    $region44: #{tpu_custom_call.1} parent=1 // pred_region
      %603 = dma.done [#allocation5], 128
    $region45: #{tpu_custom_call.1} parent=1 // pred_fallthru
      _
    %604 = vsyncpa [#allocation4], 1
    %605 = vsyncpa [#allocation7], 1
    %606 = vsyncpa [#allocation5], 1

</llo_original>
